<compile_context>
chip_gen: v6e
topology: v6e:2x2x1
jax: 0.10.0
libtpu: 0.0.40
codegen_flags: <defaults>
</compile_context>

<pallas_src>
import jax
import jax.numpy as jnp
from jax import lax
from jax.experimental import pallas as pl
from jax.experimental.pallas import tpu as pltpu
import numpy as np


def scale_sequence_attention(x, w1, w2, w_sp, bn_gamma, bn_beta, bn_mean,
                             bn_var, eps=1e-5, batch_tile=None):
    """Pallas wrapper.  x: [B, C, H, W] (NCHW), weights as in the PyTorch module.

    w1  : (Cr, C)       Conv2d(C, Cr, 1, bias=False).weight[..., 0, 0]
    w2  : (C, Cr)       Conv2d(Cr, C, 1, bias=False).weight[..., 0, 0]
    w_sp: (1, 2, 3, 3)  Conv2d(2, 1, 3, padding=1, bias=False).weight
    bn_*: (1,)          BatchNorm2d(1) params / running stats (folded).
    """
    B, C, H, W = x.shape
    Cr = w1.shape[0]
    HW = H * W

    # bf16 datapath for the bulk element-wise work when the input is bf16;
    # reductions / conv accumulation / sigmoids stay in f32.
    gate_dtype = jnp.bfloat16 if x.dtype == jnp.bfloat16 else jnp.float32

    # ---- parameter glue (plain JAX, outside the kernel) ----
    x_flat = x.reshape(B, C, HW)                              # lane-dense layout
    w1_k = jnp.transpose(w1).astype(jnp.float32)              # (C, Cr)
    w2_k = w2.astype(jnp.float32)                             # (C, Cr)

    bn_scale = (bn_gamma / jnp.sqrt(bn_var + eps)).reshape(())
    bn_shift = (bn_beta.reshape(()) - bn_mean.reshape(()) * bn_scale)
    bn_shift_arr = bn_shift.reshape(1).astype(jnp.float32)    # (1,) SMEM scalar

    # Weighted boundary masks: conv-tap weight * BN scale * 0/1 validity mask,
    # flattened lane-dense.  Center tap uses an all-ones "mask".
    r = jnp.arange(H)[:, None]
    c = jnp.arange(W)[None, :]
    wma_rows, wmm_rows = [], []
    for ky in range(3):
        for kx in range(3):
            dy, dx = ky - 1, kx - 1
            if dy == 0 and dx == 0:
                m = jnp.ones((HW,), jnp.float32)
            else:
                m = ((r + dy >= 0) & (r + dy < H) &
                     (c + dx >= 0) & (c + dx < W)).reshape(HW).astype(jnp.float32)
            wma_rows.append((bn_scale * w_sp[0, 0, ky, kx]).astype(jnp.float32) * m)
            wmm_rows.append((bn_scale * w_sp[0, 1, ky, kx]).astype(jnp.float32) * m)
    wma = jnp.stack(wma_rows, axis=0)                          # (9, HW) avg taps
    wmm = jnp.stack(wmm_rows, axis=0)                          # (9, HW) max taps

    # ---- batch tile: ~3 MiB (f32-equiv) input block; keep >=2 grid steps ----
    if batch_tile is None:
        per_image_f32 = C * HW * 4
        target = max(1, (3 * 1024 * 1024) // max(per_image_f32, 1))
        if B >= 2:
            target = min(target, B // 2)       # v7x: shard batch over 2 TCs
        batch_tile = 1
        for d in range(1, B + 1):
            if B % d == 0 and d <= target:
                batch_tile = d
    assert B % batch_tile == 0, "batch_tile must divide B"
    Bt = batch_tile

    def kernel(x_ref, w1_ref, w2_ref, wma_ref, wmm_ref, bnsh_ref, o_ref):
        # x_ref/o_ref: (Bt, C, HW) VMEM ; w1/w2: (C, Cr) VMEM
        # wma/wmm: (9, HW) VMEM weighted masks ; bnsh_ref: (1,) SMEM
        w1v = w1_ref[...]                                      # (C, Cr) f32
        w2v = w2_ref[...]                                      # (C, Cr) f32
        bnsh = bnsh_ref[0]

        xv = x_ref[...]                                        # (Bt, C, HW)

        # ---- SE-style channel attention (tiny, f32, kept off the MXU) ----
        pooled = jnp.mean(xv.astype(jnp.float32), axis=2)      # (Bt, C)
        h = jnp.sum(pooled[:, :, None] * w1v[None, :, :], axis=1)   # (Bt, Cr)
        h = jnp.maximum(h, 0.0)                                # ReLU
        logits = jnp.sum(h[:, None, :] * w2v[None, :, :], axis=2)   # (Bt, C)
        ca = jax.nn.sigmoid(logits).astype(gate_dtype)         # (Bt, C)

        x_scale = xv.astype(gate_dtype) * ca[:, :, None]       # (Bt, C, HW)

        # ---- spatial attention: channel mean/max, 3x3 conv (rolls+masks) ----
        avg = jnp.mean(x_scale.astype(jnp.float32), axis=1)    # (Bt, HW) f32
        mx = jnp.max(x_scale, axis=1).astype(jnp.float32)      # (Bt, HW) f32

        acc = jnp.zeros((Bt, HW), jnp.float32)
        for ky in range(3):
            for kx in range(3):
                dy, dx = ky - 1, kx - 1
                t = ky * 3 + kx
                sh = (-(dy * W + dx)) % HW
                if sh:
                    a_sh = pltpu.roll(avg, shift=sh, axis=1)   # full-width XLU roll
                    m_sh = pltpu.roll(mx, shift=sh, axis=1)
                else:
                    a_sh, m_sh = avg, mx
                acc = (acc
                       + a_sh * wma_ref[pl.ds(t, 1), :]
                       + m_sh * wmm_ref[pl.ds(t, 1), :])

        sa = jax.nn.sigmoid(acc + bnsh).astype(gate_dtype)     # (Bt, HW)

        # ---- single full-block, lane-dense store ----
        o_ref[...] = (x_scale * sa[:, None, :]).astype(o_ref.dtype)

    out_flat = pl.pallas_call(
        kernel,
        out_shape=jax.ShapeDtypeStruct((B, C, HW), x.dtype),
        grid=(B // Bt,),
        in_specs=[
            pl.BlockSpec((Bt, C, HW), lambda i: (i, 0, 0)),
            pl.BlockSpec((C, Cr), lambda i: (0, 0)),
            pl.BlockSpec((C, Cr), lambda i: (0, 0)),
            pl.BlockSpec((9, HW), lambda i: (0, 0)),
            pl.BlockSpec((9, HW), lambda i: (0, 0)),
            pl.BlockSpec(memory_space=pltpu.MemorySpace.SMEM),
        ],
        out_specs=pl.BlockSpec((Bt, C, HW), lambda i: (i, 0, 0)),
        compiler_params=pltpu.CompilerParams(
            dimension_semantics=("parallel",),
            vmem_limit_bytes=32 * 1024 * 1024),
    )(x_flat, w1_k, w2_k, wma, wmm, bn_shift_arr)

    return out_flat.reshape(B, C, H, W)


def reference(x, w1, w2, w_sp, bn_gamma, bn_beta, bn_mean, bn_var, eps=1e-5):
    """Pure-JAX reference matching the PyTorch forward (inference-mode BN)."""
    pooled = jnp.mean(x, axis=(2, 3))                                # (B, C)
    h = jax.nn.relu(pooled @ w1.T)                                   # (B, Cr)
    ca = jax.nn.sigmoid(h @ w2.T)                                    # (B, C)
    x_scale = x * ca[:, :, None, None]
    avg = jnp.mean(x_scale, axis=1, keepdims=True)
    mx = jnp.max(x_scale, axis=1, keepdims=True)
    sp_in = jnp.concatenate([avg, mx], axis=1)                       # (B, 2, H, W)
    conv = lax.conv_general_dilated(sp_in, w_sp, (1, 1), 'SAME',
                                    dimension_numbers=('NCHW', 'OIHW', 'NCHW'))
    scale = bn_gamma / jnp.sqrt(bn_var + eps)
    shift = bn_beta - bn_mean * scale
    sa = jax.nn.sigmoid(conv * scale + shift)
    return x_scale * sa


if __name__ == "__main__":
    B, C, H, W = 2, 32, 16, 16
    reduction = 16
    Cr = max(C // reduction, 4)

    key = jax.random.PRNGKey(0)
    k1, k2, k3, k4 = jax.random.split(key, 4)
    x = jax.random.normal(k1, (B, C, H, W), jnp.float32)
    w1 = jax.random.normal(k2, (Cr, C), jnp.float32) * 0.1        # Conv2d(C, Cr, 1)
    w2 = jax.random.normal(k3, (C, Cr), jnp.float32) * 0.1        # Conv2d(Cr, C, 1)
    w_sp = jax.random.normal(k4, (1, 2, 3, 3), jnp.float32) * 0.1  # Conv2d(2, 1, 3)
    bn_gamma = jnp.array([1.1], jnp.float32)
    bn_beta = jnp.array([0.05], jnp.float32)
    bn_mean = jnp.array([0.02], jnp.float32)
    bn_var = jnp.array([0.9], jnp.float32)

    out = scale_sequence_attention(x, w1, w2, w_sp,
                                   bn_gamma, bn_beta, bn_mean, bn_var)
    out = jax.block_until_ready(out)

    ref = reference(x, w1, w2, w_sp, bn_gamma, bn_beta, bn_mean, bn_var)
    np.testing.assert_allclose(np.asarray(out), np.asarray(ref),
                               rtol=1e-4, atol=1e-4)
    print("KERNEL_OK")
</pallas_src>

<mosaic_0001>
module attributes {stable_mosaic.version = 11 : i64} {
  func.func @kernel(%arg0: i32, %arg1: memref<1x32x256xf32, #tpu.memory_space<vmem>>, %arg2: memref<32x4xf32, #tpu.memory_space<vmem>>, %arg3: memref<32x4xf32, #tpu.memory_space<vmem>>, %arg4: memref<9x256xf32, #tpu.memory_space<vmem>>, %arg5: memref<9x256xf32, #tpu.memory_space<vmem>>, %arg6: memref<1xf32, #tpu.memory_space<smem>>, %arg7: memref<1x32x256xf32, #tpu.memory_space<vmem>>) attributes {dimension_semantics = [#tpu.dimension_semantics<parallel>], iteration_bounds = array<i64: 2>, scalar_prefetch = 0 : i64, scratch_operands = 0 : i64, tpu.core_type = #tpu.core_type<tc>, window_params = [{transform_indices = @transform_0, window_bounds = array<i64: 1, 32, 256>}, {pipeline_mode = #tpu.pipeline_mode<synchronous>, transform_indices = @transform_1, window_bounds = array<i64: 32, 4>}, {pipeline_mode = #tpu.pipeline_mode<synchronous>, transform_indices = @transform_2, window_bounds = array<i64: 32, 4>}, {pipeline_mode = #tpu.pipeline_mode<synchronous>, transform_indices = @transform_3, window_bounds = array<i64: 9, 256>}, {pipeline_mode = #tpu.pipeline_mode<synchronous>, transform_indices = @transform_4, window_bounds = array<i64: 9, 256>}, {transform_indices = @transform_5, window_bounds = array<i64: 1>}, {transform_indices = @transform_6, window_bounds = array<i64: 1, 32, 256>}]} {
    %c0 = arith.constant 0 : index
    %c0_0 = arith.constant 0 : index
    %0 = vector.load %arg2[%c0, %c0_0] : memref<32x4xf32, #tpu.memory_space<vmem>>, vector<32x4xf32>
    %c0_1 = arith.constant 0 : index
    %c0_2 = arith.constant 0 : index
    %1 = vector.load %arg3[%c0_1, %c0_2] : memref<32x4xf32, #tpu.memory_space<vmem>>, vector<32x4xf32>
    %c0_3 = arith.constant 0 : index
    %2 = memref.load %arg6[%c0_3] : memref<1xf32, #tpu.memory_space<smem>>
    %c0_4 = arith.constant 0 : index
    %c0_5 = arith.constant 0 : index
    %c0_6 = arith.constant 0 : index
    %3 = vector.load %arg1[%c0_4, %c0_5, %c0_6] : memref<1x32x256xf32, #tpu.memory_space<vmem>>, vector<1x32x256xf32>
    %cst = arith.constant dense<0.000000e+00> : vector<1x32xf32>
    %4 = vector.multi_reduction <add>, %3, %cst [2] : vector<1x32x256xf32> to vector<1x32xf32>
    %cst_7 = arith.constant 2.560000e+02 : f32
    %5 = vector.broadcast %cst_7 : f32 to vector<1x32xf32>
    %6 = arith.divf %4, %5 : vector<1x32xf32>
    %7 = vector.shape_cast %6 : vector<1x32xf32> to vector<1x32x1xf32>
    %8 = vector.shape_cast %0 : vector<32x4xf32> to vector<1x32x4xf32>
    %9 = vector.broadcast %7 : vector<1x32x1xf32> to vector<1x32x4xf32>
    %10 = arith.mulf %9, %8 : vector<1x32x4xf32>
    %cst_8 = arith.constant dense<0.000000e+00> : vector<1x4xf32>
    %11 = vector.multi_reduction <add>, %10, %cst_8 [1] : vector<1x32x4xf32> to vector<1x4xf32>
    %cst_9 = arith.constant 0.000000e+00 : f32
    %12 = vector.broadcast %cst_9 : f32 to vector<1x4xf32>
    %13 = arith.maximumf %11, %12 : vector<1x4xf32>
    %14 = vector.shape_cast %13 : vector<1x4xf32> to vector<1x1x4xf32>
    %15 = vector.shape_cast %1 : vector<32x4xf32> to vector<1x32x4xf32>
    %16 = vector.broadcast %14 : vector<1x1x4xf32> to vector<1x32x4xf32>
    %17 = arith.mulf %16, %15 : vector<1x32x4xf32>
    %cst_10 = arith.constant dense<0.000000e+00> : vector<1x32xf32>
    %18 = vector.multi_reduction <add>, %17, %cst_10 [2] : vector<1x32x4xf32> to vector<1x32xf32>
    %19 = arith.negf %18 : vector<1x32xf32>
    %20 = math.exp %19 : vector<1x32xf32>
    %cst_11 = arith.constant 1.000000e+00 : f32
    %21 = vector.broadcast %cst_11 : f32 to vector<1x32xf32>
    %22 = arith.addf %21, %20 : vector<1x32xf32>
    %23 = arith.divf %21, %22 : vector<1x32xf32>
    %24 = vector.shape_cast %23 : vector<1x32xf32> to vector<1x32x1xf32>
    %25 = vector.broadcast %24 : vector<1x32x1xf32> to vector<1x32x256xf32>
    %26 = arith.mulf %3, %25 : vector<1x32x256xf32>
    %cst_12 = arith.constant dense<0.000000e+00> : vector<1x256xf32>
    %27 = vector.multi_reduction <add>, %26, %cst_12 [1] : vector<1x32x256xf32> to vector<1x256xf32>
    %cst_13 = arith.constant 3.200000e+01 : f32
    %28 = vector.broadcast %cst_13 : f32 to vector<1x256xf32>
    %29 = arith.divf %27, %28 : vector<1x256xf32>
    %cst_14 = arith.constant dense<0xFF800000> : vector<1x256xf32>
    %30 = vector.multi_reduction <maximumf>, %26, %cst_14 [1] : vector<1x32x256xf32> to vector<1x256xf32>
    %cst_15 = arith.constant 0.000000e+00 : f32
    %31 = vector.broadcast %cst_15 : f32 to vector<1x256xf32>
    %c17_i32 = arith.constant 17 : i32
    %32 = tpu.dynamic_rotate %29 by %c17_i32 dim 1 : vector<1x256xf32>, i32 -> vector<1x256xf32>
    %c17_i32_16 = arith.constant 17 : i32
    %33 = tpu.dynamic_rotate %30 by %c17_i32_16 dim 1 : vector<1x256xf32>, i32 -> vector<1x256xf32>
    %c0_17 = arith.constant 0 : index
    %c0_18 = arith.constant 0 : index
    %34 = vector.load %arg4[%c0_17, %c0_18] : memref<9x256xf32, #tpu.memory_space<vmem>>, vector<1x256xf32>
    %35 = arith.mulf %32, %34 : vector<1x256xf32>
    %36 = arith.addf %31, %35 : vector<1x256xf32>
    %c0_19 = arith.constant 0 : index
    %c0_20 = arith.constant 0 : index
    %37 = vector.load %arg5[%c0_19, %c0_20] : memref<9x256xf32, #tpu.memory_space<vmem>>, vector<1x256xf32>
    %38 = arith.mulf %33, %37 : vector<1x256xf32>
    %39 = arith.addf %36, %38 : vector<1x256xf32>
    %c16_i32 = arith.constant 16 : i32
    %40 = tpu.dynamic_rotate %29 by %c16_i32 dim 1 : vector<1x256xf32>, i32 -> vector<1x256xf32>
    %c16_i32_21 = arith.constant 16 : i32
    %41 = tpu.dynamic_rotate %30 by %c16_i32_21 dim 1 : vector<1x256xf32>, i32 -> vector<1x256xf32>
    %c1 = arith.constant 1 : index
    %c0_22 = arith.constant 0 : index
    %42 = vector.load %arg4[%c1, %c0_22] : memref<9x256xf32, #tpu.memory_space<vmem>>, vector<1x256xf32>
    %43 = arith.mulf %40, %42 : vector<1x256xf32>
    %44 = arith.addf %39, %43 : vector<1x256xf32>
    %c1_23 = arith.constant 1 : index
    %c0_24 = arith.constant 0 : index
    %45 = vector.load %arg5[%c1_23, %c0_24] : memref<9x256xf32, #tpu.memory_space<vmem>>, vector<1x256xf32>
    %46 = arith.mulf %41, %45 : vector<1x256xf32>
    %47 = arith.addf %44, %46 : vector<1x256xf32>
    %c15_i32 = arith.constant 15 : i32
    %48 = tpu.dynamic_rotate %29 by %c15_i32 dim 1 : vector<1x256xf32>, i32 -> vector<1x256xf32>
    %c15_i32_25 = arith.constant 15 : i32
    %49 = tpu.dynamic_rotate %30 by %c15_i32_25 dim 1 : vector<1x256xf32>, i32 -> vector<1x256xf32>
    %c2 = arith.constant 2 : index
    %c0_26 = arith.constant 0 : index
    %50 = vector.load %arg4[%c2, %c0_26] : memref<9x256xf32, #tpu.memory_space<vmem>>, vector<1x256xf32>
    %51 = arith.mulf %48, %50 : vector<1x256xf32>
    %52 = arith.addf %47, %51 : vector<1x256xf32>
    %c2_27 = arith.constant 2 : index
    %c0_28 = arith.constant 0 : index
    %53 = vector.load %arg5[%c2_27, %c0_28] : memref<9x256xf32, #tpu.memory_space<vmem>>, vector<1x256xf32>
    %54 = arith.mulf %49, %53 : vector<1x256xf32>
    %55 = arith.addf %52, %54 : vector<1x256xf32>
    %c1_i32 = arith.constant 1 : i32
    %56 = tpu.dynamic_rotate %29 by %c1_i32 dim 1 : vector<1x256xf32>, i32 -> vector<1x256xf32>
    %c1_i32_29 = arith.constant 1 : i32
    %57 = tpu.dynamic_rotate %30 by %c1_i32_29 dim 1 : vector<1x256xf32>, i32 -> vector<1x256xf32>
    %c3 = arith.constant 3 : index
    %c0_30 = arith.constant 0 : index
    %58 = vector.load %arg4[%c3, %c0_30] : memref<9x256xf32, #tpu.memory_space<vmem>>, vector<1x256xf32>
    %59 = arith.mulf %56, %58 : vector<1x256xf32>
    %60 = arith.addf %55, %59 : vector<1x256xf32>
    %c3_31 = arith.constant 3 : index
    %c0_32 = arith.constant 0 : index
    %61 = vector.load %arg5[%c3_31, %c0_32] : memref<9x256xf32, #tpu.memory_space<vmem>>, vector<1x256xf32>
    %62 = arith.mulf %57, %61 : vector<1x256xf32>
    %63 = arith.addf %60, %62 : vector<1x256xf32>
    %c4 = arith.constant 4 : index
    %c0_33 = arith.constant 0 : index
    %64 = vector.load %arg4[%c4, %c0_33] : memref<9x256xf32, #tpu.memory_space<vmem>>, vector<1x256xf32>
    %65 = arith.mulf %29, %64 : vector<1x256xf32>
    %66 = arith.addf %63, %65 : vector<1x256xf32>
    %c4_34 = arith.constant 4 : index
    %c0_35 = arith.constant 0 : index
    %67 = vector.load %arg5[%c4_34, %c0_35] : memref<9x256xf32, #tpu.memory_space<vmem>>, vector<1x256xf32>
    %68 = arith.mulf %30, %67 : vector<1x256xf32>
    %69 = arith.addf %66, %68 : vector<1x256xf32>
    %c255_i32 = arith.constant 255 : i32
    %70 = tpu.dynamic_rotate %29 by %c255_i32 dim 1 : vector<1x256xf32>, i32 -> vector<1x256xf32>
    %c255_i32_36 = arith.constant 255 : i32
    %71 = tpu.dynamic_rotate %30 by %c255_i32_36 dim 1 : vector<1x256xf32>, i32 -> vector<1x256xf32>
    %c5 = arith.constant 5 : index
    %c0_37 = arith.constant 0 : index
    %72 = vector.load %arg4[%c5, %c0_37] : memref<9x256xf32, #tpu.memory_space<vmem>>, vector<1x256xf32>
    %73 = arith.mulf %70, %72 : vector<1x256xf32>
    %74 = arith.addf %69, %73 : vector<1x256xf32>
    %c5_38 = arith.constant 5 : index
    %c0_39 = arith.constant 0 : index
    %75 = vector.load %arg5[%c5_38, %c0_39] : memref<9x256xf32, #tpu.memory_space<vmem>>, vector<1x256xf32>
    %76 = arith.mulf %71, %75 : vector<1x256xf32>
    %77 = arith.addf %74, %76 : vector<1x256xf32>
    %c241_i32 = arith.constant 241 : i32
    %78 = tpu.dynamic_rotate %29 by %c241_i32 dim 1 : vector<1x256xf32>, i32 -> vector<1x256xf32>
    %c241_i32_40 = arith.constant 241 : i32
    %79 = tpu.dynamic_rotate %30 by %c241_i32_40 dim 1 : vector<1x256xf32>, i32 -> vector<1x256xf32>
    %c6 = arith.constant 6 : index
    %c0_41 = arith.constant 0 : index
    %80 = vector.load %arg4[%c6, %c0_41] : memref<9x256xf32, #tpu.memory_space<vmem>>, vector<1x256xf32>
    %81 = arith.mulf %78, %80 : vector<1x256xf32>
    %82 = arith.addf %77, %81 : vector<1x256xf32>
    %c6_42 = arith.constant 6 : index
    %c0_43 = arith.constant 0 : index
    %83 = vector.load %arg5[%c6_42, %c0_43] : memref<9x256xf32, #tpu.memory_space<vmem>>, vector<1x256xf32>
    %84 = arith.mulf %79, %83 : vector<1x256xf32>
    %85 = arith.addf %82, %84 : vector<1x256xf32>
    %c240_i32 = arith.constant 240 : i32
    %86 = tpu.dynamic_rotate %29 by %c240_i32 dim 1 : vector<1x256xf32>, i32 -> vector<1x256xf32>
    %c240_i32_44 = arith.constant 240 : i32
    %87 = tpu.dynamic_rotate %30 by %c240_i32_44 dim 1 : vector<1x256xf32>, i32 -> vector<1x256xf32>
    %c7 = arith.constant 7 : index
    %c0_45 = arith.constant 0 : index
    %88 = vector.load %arg4[%c7, %c0_45] : memref<9x256xf32, #tpu.memory_space<vmem>>, vector<1x256xf32>
    %89 = arith.mulf %86, %88 : vector<1x256xf32>
    %90 = arith.addf %85, %89 : vector<1x256xf32>
    %c7_46 = arith.constant 7 : index
    %c0_47 = arith.constant 0 : index
    %91 = vector.load %arg5[%c7_46, %c0_47] : memref<9x256xf32, #tpu.memory_space<vmem>>, vector<1x256xf32>
    %92 = arith.mulf %87, %91 : vector<1x256xf32>
    %93 = arith.addf %90, %92 : vector<1x256xf32>
    %c239_i32 = arith.constant 239 : i32
    %94 = tpu.dynamic_rotate %29 by %c239_i32 dim 1 : vector<1x256xf32>, i32 -> vector<1x256xf32>
    %c239_i32_48 = arith.constant 239 : i32
    %95 = tpu.dynamic_rotate %30 by %c239_i32_48 dim 1 : vector<1x256xf32>, i32 -> vector<1x256xf32>
    %c8 = arith.constant 8 : index
    %c0_49 = arith.constant 0 : index
    %96 = vector.load %arg4[%c8, %c0_49] : memref<9x256xf32, #tpu.memory_space<vmem>>, vector<1x256xf32>
    %97 = arith.mulf %94, %96 : vector<1x256xf32>
    %98 = arith.addf %93, %97 : vector<1x256xf32>
    %c8_50 = arith.constant 8 : index
    %c0_51 = arith.constant 0 : index
    %99 = vector.load %arg5[%c8_50, %c0_51] : memref<9x256xf32, #tpu.memory_space<vmem>>, vector<1x256xf32>
    %100 = arith.mulf %95, %99 : vector<1x256xf32>
    %101 = arith.addf %98, %100 : vector<1x256xf32>
    %102 = vector.broadcast %2 : f32 to vector<1x256xf32>
    %103 = arith.addf %101, %102 : vector<1x256xf32>
    %104 = arith.negf %103 : vector<1x256xf32>
    %105 = math.exp %104 : vector<1x256xf32>
    %cst_52 = arith.constant 1.000000e+00 : f32
    %106 = vector.broadcast %cst_52 : f32 to vector<1x256xf32>
    %107 = arith.addf %106, %105 : vector<1x256xf32>
    %108 = arith.divf %106, %107 : vector<1x256xf32>
    %109 = vector.shape_cast %108 : vector<1x256xf32> to vector<1x1x256xf32>
    %110 = vector.broadcast %109 : vector<1x1x256xf32> to vector<1x32x256xf32>
    %111 = arith.mulf %26, %110 : vector<1x32x256xf32>
    %c0_53 = arith.constant 0 : index
    %c0_54 = arith.constant 0 : index
    %c0_55 = arith.constant 0 : index
    %112 = vector.load %arg7[%c0_53, %c0_54, %c0_55] : memref<1x32x256xf32, #tpu.memory_space<vmem>>, vector<1x32x256xf32>
    tpu.vector_store %arg7[%c0_53, %c0_54, %c0_55], %111 {strides = array<i32>} : memref<1x32x256xf32, #tpu.memory_space<vmem>>, vector<1x32x256xf32>,
    return
  }
  func.func @transform_0(%arg0: i32) -> (i32, i32, i32) {
    %c0_i32 = arith.constant 0 : i32
    %c0_i32_0 = arith.constant 0 : i32
    %c0_i32_1 = arith.constant 0 : i32
    return %arg0, %c0_i32, %c0_i32_0 : i32, i32, i32
  }
  func.func @transform_1(%arg0: i32) -> (i32, i32) {
    %c0_i32 = arith.constant 0 : i32
    %c0_i32_0 = arith.constant 0 : i32
    %c0_i32_1 = arith.constant 0 : i32
    return %c0_i32, %c0_i32_0 : i32, i32
  }
  func.func @transform_2(%arg0: i32) -> (i32, i32) {
    %c0_i32 = arith.constant 0 : i32
    %c0_i32_0 = arith.constant 0 : i32
    %c0_i32_1 = arith.constant 0 : i32
    return %c0_i32, %c0_i32_0 : i32, i32
  }
  func.func @transform_3(%arg0: i32) -> (i32, i32) {
    %c0_i32 = arith.constant 0 : i32
    %c0_i32_0 = arith.constant 0 : i32
    %c0_i32_1 = arith.constant 0 : i32
    return %c0_i32, %c0_i32_0 : i32, i32
  }
  func.func @transform_4(%arg0: i32) -> (i32, i32) {
    %c0_i32 = arith.constant 0 : i32
    %c0_i32_0 = arith.constant 0 : i32
    %c0_i32_1 = arith.constant 0 : i32
    return %c0_i32, %c0_i32_0 : i32, i32
  }
  func.func @transform_5(%arg0: i32) -> i32 {
    %c0_i32 = arith.constant 0 : i32
    %c0_i32_0 = arith.constant 0 : i32
    return %c0_i32 : i32
  }
  func.func @transform_6(%arg0: i32) -> (i32, i32, i32) {
    %c0_i32 = arith.constant 0 : i32
    %c0_i32_0 = arith.constant 0 : i32
    %c0_i32_1 = arith.constant 0 : i32
    return %arg0, %c0_i32, %c0_i32_0 : i32, i32, i32
  }
}

</mosaic_0001>

<llo_original>
// kernel: tpu_custom_call.1
$region0: #{tpu_custom_call.1}
  #allocation0 [shape = 'u32[]', space=smem, size = 0x4, offset = 0x4, fixed_abs, tag = 'smem constant byte address 0x4 - core index']
  #allocation1 [shape = 'u32[144,128]{1,0:T(1,128)}', space=vmem, size = 0x12000, scoped, tag = 'internal scratch']
  #allocation2 [shape = 'f32[1]{0:T(128)S(6)}', space=smem, size = 0x200, scoped, tag = 'scoped memory for tpu_custom_call.1']
  %s0 = inlined_call_operand.hbm [shape: f32[2,32,256], index: 0, kind: input, shape index: {}]
  %s1 = inlined_call_operand.vmem [shape: f32[32,4], index: 1, kind: input, shape index: {}]
  %s2 = inlined_call_operand.vmem [shape: f32[32,4], index: 2, kind: input, shape index: {}]
  %s3 = inlined_call_operand.vmem [shape: f32[9,256], index: 3, kind: input, shape index: {}]
  %s4 = inlined_call_operand.vmem [shape: f32[9,256], index: 4, kind: input, shape index: {}]
  %s5 = inlined_call_operand.<no memory space> [shape: f32[1], index: 5, kind: input, shape index: {}]
  %s6 = inlined_call_operand.hbm [shape: f32[2,32,256], index: 6, kind: output, shape index: {}]
  %s7 = sld [smem:[#allocation0]]
  $region61: #{tpu_custom_call.1} parent=0
    _
  %s9 = ssub.s32 1, %s7
  %s10 = scalar_select 0, %s9, %s7
  %11 = sst [smem:[#allocation2]] %s5
  $region1: #{tpu_custom_call.1} parent=0
    #allocation3 [shape = 'u8[65536]{0}', space=vmem, size = 0x10000, scoped, tag = 'input window, operand 0']
    #allocation4 [shape = 's32[2]{0}', space=sflag, size = 0x8, scoped, tag = 'scoped memory for tpu_custom_call.1']
    #allocation5 [shape = 's32[2]{0}', space=sflag, size = 0x8, scoped, tag = 'scoped memory for tpu_custom_call.1']
    #allocation6 [shape = 'u8[65536]{0}', space=vmem, size = 0x10000, scoped, tag = 'output window, operand 0']
    %12 = vsyncpa [#allocation4], 0
    %s13 = scalar_lea.sflag [#allocation4], 1
    %14 = vsyncpa %s13, 0
    %15 = vsyncpa [#allocation5], 0
    %s16 = scalar_lea.sflag [#allocation5], 1
    %17 = vsyncpa %s16, 0
    loop: start=0, step=1, limit=4
    $region2: #{tpu_custom_call.1} parent=1 // loop_pre_header
      _
    $region3: #{tpu_custom_call.1} parent=1 // loop_header
      %s19 = sphi 0, %s23
      %p20 = scmp.ge.s32.totalorder %s19, 4
      %s29 = sphi 0, %s31
      %s32 = sphi 0, %s29
      %s33 = sphi 0, %s32
      %s49 = sphi 0, %s33
      %s53 = sphi 0, %s53
      %s55 = sphi 0, %s53
      %s56 = sphi 0, %s55
      %s70 = sphi 0, %s56
      %s74 = sphi 0, %s74
      %s76 = sphi 0, %s74
      %s77 = sphi 0, %s76
      %s91 = sphi 0, %s77
      %s95 = sphi 0, %s95
      %s97 = sphi 0, %s95
      %s98 = sphi 0, %s97
      %s112 = sphi 0, %s98
      %s116 = sphi 0, %s116
      %s118 = sphi 0, %s116
      %s119 = sphi 0, %s118
      %s133 = sphi 0, %s119
      %s137 = sphi 0, %s137
      %s139 = sphi 0, %s137
      %s140 = sphi 0, %s139
      %s154 = sphi 0, %s140
      %s160 = sphi 0, %s162
      %s163 = sphi 0, %s160
      %s164 = sphi 0, %s163
      %s180 = sphi 0, %s164
    $region4: #{tpu_custom_call.1} parent=1 // loop_header_branch
      %22 = sbr.rel (%p20) target = $region8
    $region5: #{tpu_custom_call.1} parent=1 // loop_body
      %s24 = ssub.s32 %s19, 1
      %s25 = ssub.s32 %s19, 2
      %s26 = sadd.s32 %s19, 1
      %s27 = ssub.s32 %s19, %s26
      %p28 = scmp.eq.s32.totalorder %s27, 0
      %s30 = sadd.s32 %s29, 1
      %s31 = scalar_select %p28, %s29, %s30
      %p34 = pneg %p28
      %p35 = scmp.eq.s32.totalorder %s19, 1
      %p36 = por %p34, %p35
      %p37 = scmp.ne.s32.totalorder %s29, %s32
      %p38 = scmp.eq.s32.totalorder %s19, 0
      %p39 = por %p37, %p38
      %p40 = scmp.ne.s32.totalorder %s29, %s32
      %p41 = scmp.eq.s32.totalorder %s24, 1
      %p42 = por %p40, %p41
      %p43 = scmp.ne.s32.totalorder %s32, %s33
      %p44 = scmp.eq.s32.totalorder %s24, 0
      %p45 = por %p43, %p44
      %p46 = scmp.ne.s32.totalorder %s32, %s33
      %p47 = scmp.eq.s32.totalorder %s25, 1
      %p48 = por %p46, %p47
      %p50 = scmp.ne.s32.totalorder %s33, %s49
      %p51 = scmp.eq.s32.totalorder %s25, 0
      %p52 = por %p50, %p51
      %s54 = sadd.s32 %s53, 1
      %p57 = scmp.eq.s32.totalorder %s19, 1
      %p58 = scmp.ne.s32.totalorder %s53, %s55
      %p59 = scmp.eq.s32.totalorder %s19, 0
      %p60 = por %p58, %p59
      %p61 = scmp.ne.s32.totalorder %s53, %s55
      %p62 = scmp.eq.s32.totalorder %s24, 1
      %p63 = por %p61, %p62
      %p64 = scmp.ne.s32.totalorder %s55, %s56
      %p65 = scmp.eq.s32.totalorder %s24, 0
      %p66 = por %p64, %p65
      %p67 = scmp.ne.s32.totalorder %s55, %s56
      %p68 = scmp.eq.s32.totalorder %s25, 1
      %p69 = por %p67, %p68
      %p71 = scmp.ne.s32.totalorder %s56, %s70
      %p72 = scmp.eq.s32.totalorder %s25, 0
      %p73 = por %p71, %p72
      %s75 = sadd.s32 %s74, 1
      %p78 = scmp.eq.s32.totalorder %s19, 1
      %p79 = scmp.ne.s32.totalorder %s74, %s76
      %p80 = scmp.eq.s32.totalorder %s19, 0
      %p81 = por %p79, %p80
      %p82 = scmp.ne.s32.totalorder %s74, %s76
      %p83 = scmp.eq.s32.totalorder %s24, 1
      %p84 = por %p82, %p83
      %p85 = scmp.ne.s32.totalorder %s76, %s77
      %p86 = scmp.eq.s32.totalorder %s24, 0
      %p87 = por %p85, %p86
      %p88 = scmp.ne.s32.totalorder %s76, %s77
      %p89 = scmp.eq.s32.totalorder %s25, 1
      %p90 = por %p88, %p89
      %p92 = scmp.ne.s32.totalorder %s77, %s91
      %p93 = scmp.eq.s32.totalorder %s25, 0
      %p94 = por %p92, %p93
      %s96 = sadd.s32 %s95, 1
      %p99 = scmp.eq.s32.totalorder %s19, 1
      %p100 = scmp.ne.s32.totalorder %s95, %s97
      %p101 = scmp.eq.s32.totalorder %s19, 0
      %p102 = por %p100, %p101
      %p103 = scmp.ne.s32.totalorder %s95, %s97
      %p104 = scmp.eq.s32.totalorder %s24, 1
      %p105 = por %p103, %p104
      %p106 = scmp.ne.s32.totalorder %s97, %s98
      %p107 = scmp.eq.s32.totalorder %s24, 0
      %p108 = por %p106, %p107
      %p109 = scmp.ne.s32.totalorder %s97, %s98
      %p110 = scmp.eq.s32.totalorder %s25, 1
      %p111 = por %p109, %p110
      %p113 = scmp.ne.s32.totalorder %s98, %s112
      %p114 = scmp.eq.s32.totalorder %s25, 0
      %p115 = por %p113, %p114
      %s117 = sadd.s32 %s116, 1
      %p120 = scmp.eq.s32.totalorder %s19, 1
      %p121 = scmp.ne.s32.totalorder %s116, %s118
      %p122 = scmp.eq.s32.totalorder %s19, 0
      %p123 = por %p121, %p122
      %p124 = scmp.ne.s32.totalorder %s116, %s118
      %p125 = scmp.eq.s32.totalorder %s24, 1
      %p126 = por %p124, %p125
      %p127 = scmp.ne.s32.totalorder %s118, %s119
      %p128 = scmp.eq.s32.totalorder %s24, 0
      %p129 = por %p127, %p128
      %p130 = scmp.ne.s32.totalorder %s118, %s119
      %p131 = scmp.eq.s32.totalorder %s25, 1
      %p132 = por %p130, %p131
      %p134 = scmp.ne.s32.totalorder %s119, %s133
      %p135 = scmp.eq.s32.totalorder %s25, 0
      %p136 = por %p134, %p135
      %s138 = sadd.s32 %s137, 1
      %p141 = scmp.eq.s32.totalorder %s19, 1
      %p142 = scmp.ne.s32.totalorder %s137, %s139
      %p143 = scmp.eq.s32.totalorder %s19, 0
      %p144 = por %p142, %p143
      %p145 = scmp.ne.s32.totalorder %s137, %s139
      %p146 = scmp.eq.s32.totalorder %s24, 1
      %p147 = por %p145, %p146
      %p148 = scmp.ne.s32.totalorder %s139, %s140
      %p149 = scmp.eq.s32.totalorder %s24, 0
      %p150 = por %p148, %p149
      %p151 = scmp.ne.s32.totalorder %s139, %s140
      %p152 = scmp.eq.s32.totalorder %s25, 1
      %p153 = por %p151, %p152
      %p155 = scmp.ne.s32.totalorder %s140, %s154
      %p156 = scmp.eq.s32.totalorder %s25, 0
      %p157 = por %p155, %p156
      %s158 = ssub.s32 %s19, %s26
      %p159 = scmp.eq.s32.totalorder %s158, 0
      %s161 = sadd.s32 %s160, 1
      %s162 = scalar_select %p159, %s160, %s161
      %p165 = pneg %p159
      %p166 = scmp.eq.s32.totalorder %s19, 1
      %p167 = por %p165, %p166
      %p168 = scmp.ne.s32.totalorder %s160, %s163
      %p169 = scmp.eq.s32.totalorder %s19, 0
      %p170 = por %p168, %p169
      %p171 = scmp.ne.s32.totalorder %s160, %s163
      %p172 = scmp.eq.s32.totalorder %s24, 1
      %p173 = por %p171, %p172
      %p174 = scmp.ne.s32.totalorder %s163, %s164
      %p175 = scmp.eq.s32.totalorder %s24, 0
      %p176 = por %p174, %p175
      %p177 = scmp.ne.s32.totalorder %s163, %s164
      %p178 = scmp.eq.s32.totalorder %s25, 1
      %p179 = por %p177, %p178
      %p181 = scmp.ne.s32.totalorder %s164, %s180
      %p182 = scmp.eq.s32.totalorder %s25, 0
      %p183 = por %p181, %p182
      %p184 = scmp.le.s32.totalorder 1, %s19
      %p185 = scmp.lt.s32.totalorder %s19, 3
      %p186 = pnand %p184, %p185
      %p187 = pneg %p186
      // Predicated region
      $region9: #{tpu_custom_call.1} parent=5 // pred_check
        _
      $region10: #{tpu_custom_call.1} parent=5 // pred_check_branch
        %189 = sbr.rel (%p186) target = $region12
      $region11: #{tpu_custom_call.1} parent=5 // pred_region
        %s190 = ssub.s32 %s19, 1
        // Predicated region
        $region13: #{tpu_custom_call.1} parent=11 // pred_check
          %p191 = pneg %p66
        $region14: #{tpu_custom_call.1} parent=11 // pred_check_branch
          %193 = sbr.rel (%p191) target = $region16
        $region15: #{tpu_custom_call.1} parent=11 // pred_region
          _
        $region16: #{tpu_custom_call.1} parent=11 // pred_fallthru
          _
        // Predicated region
        $region17: #{tpu_custom_call.1} parent=11 // pred_check
          %p194 = pneg %p87
        $region18: #{tpu_custom_call.1} parent=11 // pred_check_branch
          %196 = sbr.rel (%p194) target = $region20
        $region19: #{tpu_custom_call.1} parent=11 // pred_region
          _
        $region20: #{tpu_custom_call.1} parent=11 // pred_fallthru
          _
        // Predicated region
        $region21: #{tpu_custom_call.1} parent=11 // pred_check
          %p197 = pneg %p108
        $region22: #{tpu_custom_call.1} parent=11 // pred_check_branch
          %199 = sbr.rel (%p197) target = $region24
        $region23: #{tpu_custom_call.1} parent=11 // pred_region
          _
        $region24: #{tpu_custom_call.1} parent=11 // pred_fallthru
          _
        // Predicated region
        $region25: #{tpu_custom_call.1} parent=11 // pred_check
          %p200 = pneg %p129
        $region26: #{tpu_custom_call.1} parent=11 // pred_check_branch
          %202 = sbr.rel (%p200) target = $region28
        $region27: #{tpu_custom_call.1} parent=11 // pred_region
          _
        $region28: #{tpu_custom_call.1} parent=11 // pred_fallthru
          _
        // Predicated region
        $region29: #{tpu_custom_call.1} parent=11 // pred_check
          %p203 = pneg %p150
        $region30: #{tpu_custom_call.1} parent=11 // pred_check_branch
          %205 = sbr.rel (%p203) target = $region32
        $region31: #{tpu_custom_call.1} parent=11 // pred_region
          _
        $region32: #{tpu_custom_call.1} parent=11 // pred_fallthru
          _
      $region12: #{tpu_custom_call.1} parent=5 // pred_fallthru
        _
      %p206 = scmp.lt.s32.totalorder %s19, 2
      // Predicated region
      $region33: #{tpu_custom_call.1} parent=5 // pred_check
        %p207 = pneg %p206
      $region34: #{tpu_custom_call.1} parent=5 // pred_check_branch
        %209 = sbr.rel (%p207) target = $region36
      $region35: #{tpu_custom_call.1} parent=5 // pred_region
        // Predicated region
        $region37: #{tpu_custom_call.1} parent=35 // pred_check
          %p210 = pneg %p39
        $region38: #{tpu_custom_call.1} parent=35 // pred_check_branch
          %212 = sbr.rel (%p210) target = $region40
        $region39: #{tpu_custom_call.1} parent=35 // pred_region
          %s213 = sand.u32 %s29, 1
          %s214 = scalar_lea.sflag [#allocation4], %s213
          %s215 = sand.u32 %s29, 1
          %s216 = smul.addr %s215, 64
          %s217 = scalar_lea.vmem [#allocation3], %s216
          %s219 = ssub.s32 1024, 1024
          %220 = vsyncadd %s214, %s219
          %s221 = smul.addr %s19, 8
          %s222 = smul.addr %s221, 128
          %s223 = scalar_lea.hbm %s0, %s222
          %s224 = sshll.u32 %s217, 4
          %s225 = int_to_ptr.vmem [resolvable:$true] %s224
          %230 = dma.hbm_to_vmem [thread:$0]  %s223, 1024, %s225, %s214, 256, 256, 16
        $region40: #{tpu_custom_call.1} parent=35 // pred_fallthru
          _
      $region36: #{tpu_custom_call.1} parent=5 // pred_fallthru
        _
      %p231 = scmp.le.s32.totalorder 1, %s19
      %p232 = scmp.lt.s32.totalorder %s19, 3
      %p233 = pnand %p231, %p232
      %p234 = pneg %p233
      // Predicated region
      $region41: #{tpu_custom_call.1} parent=5 // pred_check
        _
      $region42: #{tpu_custom_call.1} parent=5 // pred_check_branch
        %236 = sbr.rel (%p233) target = $region44
      $region43: #{tpu_custom_call.1} parent=5 // pred_region
        %s237 = ssub.s32 %s19, 1
        %s238 = sand.u32 %s32, 1
        %s239 = scalar_lea.sflag [#allocation4], %s238
        %s240 = sand.u32 %s32, 1
        %s241 = smul.addr %s240, 64
        %s242 = scalar_lea.vmem [#allocation3], %s241
        // Predicated region
        $region45: #{tpu_custom_call.1} parent=43 // pred_check
          %p243 = pneg %p45
        $region46: #{tpu_custom_call.1} parent=43 // pred_check_branch
          %245 = sbr.rel (%p243) target = $region48
        $region47: #{tpu_custom_call.1} parent=43 // pred_region
          %246 = dma.done %s239, 1024
        $region48: #{tpu_custom_call.1} parent=43 // pred_fallthru
          _
        %s247 = sand.u32 %s32, 1
        %s248 = scalar_lea.sflag [#allocation4], %s247
        %s249 = sand.u32 %s32, 1
        %s250 = smul.addr %s249, 64
        %s251 = scalar_lea.vmem [#allocation3], %s250
        %p252 = pneg %p45
        %p253 = pneg %p42
        %p254 = pneg %p66
        %p255 = pneg %p63
        %p256 = pneg %p87
        %p257 = pneg %p84
        %p258 = pneg %p108
        %p259 = pneg %p105
        %p260 = pneg %p129
        %p261 = pneg %p126
        %p262 = pneg %p150
        %p263 = pneg %p147
        %p264 = pneg %p176
        %p265 = pneg %p173
        %s266 = sand.u32 %s163, 1
        %s267 = scalar_lea.sflag [#allocation5], %s266
        %s268 = sand.u32 %s163, 1
        %s269 = smul.addr %s268, 64
        %s270 = scalar_lea.vmem [#allocation6], %s269
        %v271 = vld [vmem:[%s1] sm:$0xff]
        %v272 = vld [vmem:[%s1 + $0x8] sm:$0xff]
        %v273 = vld [vmem:[%s1 + $0x10] sm:$0xff]
        %v274 = vld [vmem:[%s1 + $0x18] sm:$0xff]
        %v275 = vld [vmem:[%s2] sm:$0xff]
        %v276 = vld [vmem:[%s2 + $0x8] sm:$0xff]
        %v277 = vld [vmem:[%s2 + $0x10] sm:$0xff]
        %v278 = vld [vmem:[%s2 + $0x18] sm:$0xff]
        %s279 = sld [smem:[#allocation2]]
        %v280 = vld [vmem:[%s242] sm:$0xff]
        %v281 = vld [vmem:[%s242 + $0x8] sm:$0xff]
        %v282 = vld [vmem:[%s242 + $0x10] sm:$0xff]
        %v283 = vld [vmem:[%s242 + $0x18] sm:$0xff]
        %v284 = vld [vmem:[%s242 + $0x20] sm:$0xff]
        %v285 = vld [vmem:[%s242 + $0x28] sm:$0xff]
        %v286 = vld [vmem:[%s242 + $0x30] sm:$0xff]
        %v287 = vld [vmem:[%s242 + $0x38] sm:$0xff]
        %v288 = vadd.f32 %v280, %v281
        %289 = vadd.xlane.f32.xlu0 %v288
        %v290 = vpop.xlane.xlu0 %289
        %v291 = vadd.f32 %v282, %v283
        %292 = vadd.xlane.f32.xlu0 %v291
        %v293 = vpop.xlane.xlu0 %292
        %v294 = vadd.f32 %v284, %v285
        %295 = vadd.xlane.f32.xlu0 %v294
        %v296 = vpop.xlane.xlu0 %295
        %v297 = vadd.f32 %v286, %v287
        %298 = vadd.xlane.f32.xlu0 %v297
        %v299 = vpop.xlane.xlu0 %298
        %v300 = vrcp.pop 256.0
        %v301 = vmul.f32 %v290, %v300
        %v302 = vmul.f32 %v293, %v300
        %v303 = vmul.f32 %v296, %v300
        %v304 = vmul.f32 %v299, %v300
        %v305 = vmul.f32 %v301, %v271
        %v306 = vmul.f32 %v302, %v272
        %v307 = vmul.f32 %v303, %v273
        %v308 = vmul.f32 %v304, %v274
        %vm309 = vcmask 31744
        %v310 = vsel %vm309, %v305, 0.0
        %v311 = vsel %vm309, %v306, 0.0
        %v312 = vadd.f32 %v310, %v311
        %v313 = vsel %vm309, %v307, 0.0
        %v314 = vadd.f32 %v312, %v313
        %v315 = vsel %vm309, %v308, 0.0
        %v316 = vadd.f32 %v314, %v315
        %v317 = vrot.slane %v316, 4
        %v318 = vadd.f32 %v316, %v317
        %v319 = vrot.slane %v318, 2
        %v320 = vadd.f32 %v318, %v319
        %v321 = vrot.slane %v320, 1
        %v322 = vadd.f32 %v320, %v321
        %v323 = vmax.f32 %v322, 0.0
        %v324 = vmul.f32 %v323, %v275
        %v325 = vmul.f32 %v323, %v276
        %v326 = vmul.f32 %v323, %v277
        %v327 = vmul.f32 %v323, %v278
        %v328 = vsel %vm309, %v324, 0.0
        %329 = vadd.xlane.f32.xlu0 %v328
        %v330 = vpop.xlane.xlu0 %329
        %v331 = vsel %vm309, %v325, 0.0
        %332 = vadd.xlane.f32.xlu0 %v331
        %v333 = vpop.xlane.xlu0 %332
        %v334 = vsel %vm309, %v326, 0.0
        %335 = vadd.xlane.f32.xlu0 %v334
        %v336 = vpop.xlane.xlu0 %335
        %v337 = vsel %vm309, %v327, 0.0
        %338 = vadd.xlane.f32.xlu0 %v337
        %v339 = vpop.xlane.xlu0 %338
        %v340 = vxor.u32 %v330, 2147483648
        %v341 = vxor.u32 %v333, 2147483648
        %v342 = vxor.u32 %v336, 2147483648
        %v343 = vxor.u32 %v339, 2147483648
        %v344 = vmul.f32 %v340, 1.442695
        %v345 = vpow.pop %v344
        %v346 = vmul.f32 %v341, 1.442695
        %v347 = vpow.pop %v346
        %v348 = vmul.f32 %v342, 1.442695
        %v349 = vpow.pop %v348
        %v350 = vmul.f32 %v343, 1.442695
        %v351 = vpow.pop %v350
        %v352 = vadd.f32 %v345, 1.0
        %v353 = vadd.f32 %v347, 1.0
        %v354 = vadd.f32 %v349, 1.0
        %v355 = vadd.f32 %v351, 1.0
        %v356 = vrcp.pop %v352
        %v357 = vmul.f32 1.0, %v356
        %v358 = vrcp.pop %v353
        %v359 = vmul.f32 1.0, %v358
        %v360 = vrcp.pop %v354
        %v361 = vmul.f32 1.0, %v360
        %v362 = vrcp.pop %v355
        %v363 = vmul.f32 1.0, %v362
        %v364 = vmul.f32 %v280, %v357
        %v365 = vmul.f32 %v281, %v357
        %v366 = vmul.f32 %v282, %v359
        %v367 = vmul.f32 %v283, %v359
        %v368 = vmul.f32 %v284, %v361
        %v369 = vmul.f32 %v285, %v361
        %v370 = vmul.f32 %v286, %v363
        %v371 = vmul.f32 %v287, %v363
        %v372 = vadd.f32 %v364, %v366
        %v373 = vadd.f32 %v372, %v368
        %v374 = vadd.f32 %v373, %v370
        %v375 = vrot.slane %v374, 4
        %v376 = vadd.f32 %v374, %v375
        %v377 = vrot.slane %v376, 2
        %v378 = vadd.f32 %v376, %v377
        %v379 = vrot.slane %v378, 1
        %v380 = vadd.f32 %v378, %v379
        %v381 = vadd.f32 %v365, %v367
        %v382 = vadd.f32 %v381, %v369
        %v383 = vadd.f32 %v382, %v371
        %v384 = vrot.slane %v383, 4
        %v385 = vadd.f32 %v383, %v384
        %v386 = vrot.slane %v385, 2
        %v387 = vadd.f32 %v385, %v386
        %v388 = vrot.slane %v387, 1
        %v389 = vadd.f32 %v387, %v388
        %v390 = vrcp.pop 32.0
        %v391 = vmul.f32 %v380, %v390
        %v392 = vmul.f32 %v389, %v390
        %v393 = vmax.f32 %v364, %v368
        %v394 = vmax.f32 %v366, %v370
        %v395 = vmax.f32 %v393, %v394
        %v396 = vrot.slane %v395, 4
        %v397 = vmax.f32 %v395, %v396
        %v398 = vrot.slane %v397, 2
        %v399 = vmax.f32 %v397, %v398
        %v400 = vrot.slane %v399, 1
        %v401 = vmax.f32 %v399, %v400
        %v402 = vmax.f32 %v365, %v369
        %v403 = vmax.f32 %v367, %v371
        %v404 = vmax.f32 %v402, %v403
        %v405 = vrot.slane %v404, 4
        %v406 = vmax.f32 %v404, %v405
        %v407 = vrot.slane %v406, 2
        %v408 = vmax.f32 %v406, %v407
        %v409 = vrot.slane %v408, 1
        %v410 = vmax.f32 %v408, %v409
        %411 = vrot.lane.b32.xlu0 %v391, 17
        %v412 = vpop.permute.xlu0 %411
        %413 = vrot.lane.b32.xlu0 %v392, 17
        %v414 = vpop.permute.xlu0 %413
        %v415 = vlaneseq
        %v416 = vand.u32 %v415, 127
        %vm417 = vcmp.lt.s32.totalorder %v416, 17
        %v418 = vsel %vm417, %v412, %v414
        %v419 = vsel %vm417, %v414, %v412
        %420 = vrot.lane.b32.xlu0 %v401, 17
        %v421 = vpop.permute.xlu0 %420
        %422 = vrot.lane.b32.xlu0 %v410, 17
        %v423 = vpop.permute.xlu0 %422
        %v424 = vsel %vm417, %v421, %v423
        %v425 = vsel %vm417, %v423, %v421
        %v426 = vld [vmem:[%s3] ss:$8 sm:$0x3]
        %v428 = vlaneseq
        %v429 = vshrl.u32 %v428, 7
        %v430 = vsub.s32 0, %v429
        %v431 = vrot.slane %v426, %v430
        %v432 = vlaneseq
        %v433 = vshrl.u32 %v432, 7
        %v434 = vsub.s32 1, %v433
        %v435 = vrot.slane %v426, %v434
        %v438 = vmul.f32 %v419, %v431
        %v439 = vmul.f32 %v418, %v435
        %v440 = vadd.f32 %v438, 0.0
        %v441 = vadd.f32 %v439, 0.0
        %v442 = vld [vmem:[%s4] ss:$8 sm:$0x3]
        %v444 = vlaneseq
        %v445 = vshrl.u32 %v444, 7
        %v446 = vsub.s32 0, %v445
        %v447 = vrot.slane %v442, %v446
        %v448 = vlaneseq
        %v449 = vshrl.u32 %v448, 7
        %v450 = vsub.s32 1, %v449
        %v451 = vrot.slane %v442, %v450
        %v454 = vmul.f32 %v425, %v447
        %v455 = vmul.f32 %v424, %v451
        %v456 = vadd.f32 %v440, %v454
        %v457 = vadd.f32 %v441, %v455
        %458 = vrot.lane.b32.xlu0 %v391, 16
        %v459 = vpop.permute.xlu0 %458
        %460 = vrot.lane.b32.xlu0 %v392, 16
        %v461 = vpop.permute.xlu0 %460
        %vm462 = vcmp.lt.s32.totalorder %v416, 16
        %v463 = vsel %vm462, %v459, %v461
        %v464 = vsel %vm462, %v461, %v459
        %465 = vrot.lane.b32.xlu0 %v401, 16
        %v466 = vpop.permute.xlu0 %465
        %467 = vrot.lane.b32.xlu0 %v410, 16
        %v468 = vpop.permute.xlu0 %467
        %v469 = vsel %vm462, %v466, %v468
        %v470 = vsel %vm462, %v468, %v466
        %s471 = scalar_lea.vmem %s3, 1
        %v472 = vld [vmem:[%s471] ss:$8 sm:$0x3]
        %v474 = vlaneseq
        %v475 = vshrl.u32 %v474, 7
        %v476 = vsub.s32 0, %v475
        %v477 = vrot.slane %v472, %v476
        %v478 = vlaneseq
        %v479 = vshrl.u32 %v478, 7
        %v480 = vsub.s32 1, %v479
        %v481 = vrot.slane %v472, %v480
        %v484 = vmul.f32 %v464, %v477
        %v485 = vmul.f32 %v463, %v481
        %v486 = vadd.f32 %v456, %v484
        %v487 = vadd.f32 %v457, %v485
        %s488 = scalar_lea.vmem %s4, 1
        %v489 = vld [vmem:[%s488] ss:$8 sm:$0x3]
        %v491 = vlaneseq
        %v492 = vshrl.u32 %v491, 7
        %v493 = vsub.s32 0, %v492
        %v494 = vrot.slane %v489, %v493
        %v495 = vlaneseq
        %v496 = vshrl.u32 %v495, 7
        %v497 = vsub.s32 1, %v496
        %v498 = vrot.slane %v489, %v497
        %v501 = vmul.f32 %v470, %v494
        %v502 = vmul.f32 %v469, %v498
        %v503 = vadd.f32 %v486, %v501
        %v504 = vadd.f32 %v487, %v502
        %505 = vrot.lane.b32.xlu0 %v391, 15
        %v506 = vpop.permute.xlu0 %505
        %507 = vrot.lane.b32.xlu0 %v392, 15
        %v508 = vpop.permute.xlu0 %507
        %vm509 = vcmp.lt.s32.totalorder %v416, 15
        %v510 = vsel %vm509, %v506, %v508
        %v511 = vsel %vm509, %v508, %v506
        %512 = vrot.lane.b32.xlu0 %v401, 15
        %v513 = vpop.permute.xlu0 %512
        %514 = vrot.lane.b32.xlu0 %v410, 15
        %v515 = vpop.permute.xlu0 %514
        %v516 = vsel %vm509, %v513, %v515
        %v517 = vsel %vm509, %v515, %v513
        %s518 = scalar_lea.vmem %s3, 2
        %v519 = vld [vmem:[%s518] ss:$8 sm:$0x3]
        %v521 = vlaneseq
        %v522 = vshrl.u32 %v521, 7
        %v523 = vsub.s32 0, %v522
        %v524 = vrot.slane %v519, %v523
        %v525 = vlaneseq
        %v526 = vshrl.u32 %v525, 7
        %v527 = vsub.s32 1, %v526
        %v528 = vrot.slane %v519, %v527
        %v531 = vmul.f32 %v511, %v524
        %v532 = vmul.f32 %v510, %v528
        %v533 = vadd.f32 %v503, %v531
        %v534 = vadd.f32 %v504, %v532
        %s535 = scalar_lea.vmem %s4, 2
        %v536 = vld [vmem:[%s535] ss:$8 sm:$0x3]
        %v538 = vlaneseq
        %v539 = vshrl.u32 %v538, 7
        %v540 = vsub.s32 0, %v539
        %v541 = vrot.slane %v536, %v540
        %v542 = vlaneseq
        %v543 = vshrl.u32 %v542, 7
        %v544 = vsub.s32 1, %v543
        %v545 = vrot.slane %v536, %v544
        %v548 = vmul.f32 %v517, %v541
        %v549 = vmul.f32 %v516, %v545
        %v550 = vadd.f32 %v533, %v548
        %v551 = vadd.f32 %v534, %v549
        %552 = vrot.lane.b32.xlu0 %v391, 1
        %v553 = vpop.permute.xlu0 %552
        %554 = vrot.lane.b32.xlu0 %v392, 1
        %v555 = vpop.permute.xlu0 %554
        %vm556 = vcmp.lt.s32.totalorder %v416, 1
        %v557 = vsel %vm556, %v553, %v555
        %v558 = vsel %vm556, %v555, %v553
        %559 = vrot.lane.b32.xlu0 %v401, 1
        %v560 = vpop.permute.xlu0 %559
        %561 = vrot.lane.b32.xlu0 %v410, 1
        %v562 = vpop.permute.xlu0 %561
        %v563 = vsel %vm556, %v560, %v562
        %v564 = vsel %vm556, %v562, %v560
        %s565 = scalar_lea.vmem %s3, 3
        %v566 = vld [vmem:[%s565] ss:$8 sm:$0x3]
        %v568 = vlaneseq
        %v569 = vshrl.u32 %v568, 7
        %v570 = vsub.s32 0, %v569
        %v571 = vrot.slane %v566, %v570
        %v572 = vlaneseq
        %v573 = vshrl.u32 %v572, 7
        %v574 = vsub.s32 1, %v573
        %v575 = vrot.slane %v566, %v574
        %v578 = vmul.f32 %v558, %v571
        %v579 = vmul.f32 %v557, %v575
        %v580 = vadd.f32 %v550, %v578
        %v581 = vadd.f32 %v551, %v579
        %s582 = scalar_lea.vmem %s4, 3
        %v583 = vld [vmem:[%s582] ss:$8 sm:$0x3]
        %v585 = vlaneseq
        %v586 = vshrl.u32 %v585, 7
        %v587 = vsub.s32 0, %v586
        %v588 = vrot.slane %v583, %v587
        %v589 = vlaneseq
        %v590 = vshrl.u32 %v589, 7
        %v591 = vsub.s32 1, %v590
        %v592 = vrot.slane %v583, %v591
        %v595 = vmul.f32 %v564, %v588
        %v596 = vmul.f32 %v563, %v592
        %v597 = vadd.f32 %v580, %v595
        %v598 = vadd.f32 %v581, %v596
        %s599 = scalar_lea.vmem %s3, 4
        %v600 = vld [vmem:[%s599] ss:$8 sm:$0x3]
        %v602 = vlaneseq
        %v603 = vshrl.u32 %v602, 7
        %v604 = vsub.s32 0, %v603
        %v605 = vrot.slane %v600, %v604
        %v606 = vlaneseq
        %v607 = vshrl.u32 %v606, 7
        %v608 = vsub.s32 1, %v607
        %v609 = vrot.slane %v600, %v608
        %v612 = vmul.f32 %v391, %v605
        %v613 = vmul.f32 %v392, %v609
        %v614 = vadd.f32 %v597, %v612
        %v615 = vadd.f32 %v598, %v613
        %s616 = scalar_lea.vmem %s4, 4
        %v617 = vld [vmem:[%s616] ss:$8 sm:$0x3]
        %v619 = vlaneseq
        %v620 = vshrl.u32 %v619, 7
        %v621 = vsub.s32 0, %v620
        %v622 = vrot.slane %v617, %v621
        %v623 = vlaneseq
        %v624 = vshrl.u32 %v623, 7
        %v625 = vsub.s32 1, %v624
        %v626 = vrot.slane %v617, %v625
        %v629 = vmul.f32 %v401, %v622
        %v630 = vmul.f32 %v410, %v626
        %v631 = vadd.f32 %v614, %v629
        %v632 = vadd.f32 %v615, %v630
        %633 = vrot.lane.b32.xlu0 %v391, 127
        %v634 = vpop.permute.xlu0 %633
        %635 = vrot.lane.b32.xlu0 %v392, 127
        %v636 = vpop.permute.xlu0 %635
        %vm637 = vcmp.lt.s32.totalorder %v416, 127
        %v638 = vsel %vm637, %v634, %v636
        %v639 = vsel %vm637, %v636, %v634
        %640 = vrot.lane.b32.xlu0 %v401, 127
        %v641 = vpop.permute.xlu0 %640
        %642 = vrot.lane.b32.xlu0 %v410, 127
        %v643 = vpop.permute.xlu0 %642
        %v644 = vsel %vm637, %v641, %v643
        %v645 = vsel %vm637, %v643, %v641
        %s646 = scalar_lea.vmem %s3, 5
        %v647 = vld [vmem:[%s646] ss:$8 sm:$0x3]
        %v649 = vlaneseq
        %v650 = vshrl.u32 %v649, 7
        %v651 = vsub.s32 0, %v650
        %v652 = vrot.slane %v647, %v651
        %v653 = vlaneseq
        %v654 = vshrl.u32 %v653, 7
        %v655 = vsub.s32 1, %v654
        %v656 = vrot.slane %v647, %v655
        %v659 = vmul.f32 %v638, %v652
        %v660 = vmul.f32 %v639, %v656
        %v661 = vadd.f32 %v631, %v659
        %v662 = vadd.f32 %v632, %v660
        %s663 = scalar_lea.vmem %s4, 5
        %v664 = vld [vmem:[%s663] ss:$8 sm:$0x3]
        %v666 = vlaneseq
        %v667 = vshrl.u32 %v666, 7
        %v668 = vsub.s32 0, %v667
        %v669 = vrot.slane %v664, %v668
        %v670 = vlaneseq
        %v671 = vshrl.u32 %v670, 7
        %v672 = vsub.s32 1, %v671
        %v673 = vrot.slane %v664, %v672
        %v676 = vmul.f32 %v644, %v669
        %v677 = vmul.f32 %v645, %v673
        %v678 = vadd.f32 %v661, %v676
        %v679 = vadd.f32 %v662, %v677
        %680 = vrot.lane.b32.xlu0 %v391, 113
        %v681 = vpop.permute.xlu0 %680
        %682 = vrot.lane.b32.xlu0 %v392, 113
        %v683 = vpop.permute.xlu0 %682
        %vm684 = vcmp.lt.s32.totalorder %v416, 113
        %v685 = vsel %vm684, %v681, %v683
        %v686 = vsel %vm684, %v683, %v681
        %687 = vrot.lane.b32.xlu0 %v401, 113
        %v688 = vpop.permute.xlu0 %687
        %689 = vrot.lane.b32.xlu0 %v410, 113
        %v690 = vpop.permute.xlu0 %689
        %v691 = vsel %vm684, %v688, %v690
        %v692 = vsel %vm684, %v690, %v688
        %s693 = scalar_lea.vmem %s3, 6
        %v694 = vld [vmem:[%s693] ss:$8 sm:$0x3]
        %v696 = vlaneseq
        %v697 = vshrl.u32 %v696, 7
        %v698 = vsub.s32 0, %v697
        %v699 = vrot.slane %v694, %v698
        %v700 = vlaneseq
        %v701 = vshrl.u32 %v700, 7
        %v702 = vsub.s32 1, %v701
        %v703 = vrot.slane %v694, %v702
        %v706 = vmul.f32 %v685, %v699
        %v707 = vmul.f32 %v686, %v703
        %v708 = vadd.f32 %v678, %v706
        %v709 = vadd.f32 %v679, %v707
        %s710 = scalar_lea.vmem %s4, 6
        %v711 = vld [vmem:[%s710] ss:$8 sm:$0x3]
        %v713 = vlaneseq
        %v714 = vshrl.u32 %v713, 7
        %v715 = vsub.s32 0, %v714
        %v716 = vrot.slane %v711, %v715
        %v717 = vlaneseq
        %v718 = vshrl.u32 %v717, 7
        %v719 = vsub.s32 1, %v718
        %v720 = vrot.slane %v711, %v719
        %v723 = vmul.f32 %v691, %v716
        %v724 = vmul.f32 %v692, %v720
        %v725 = vadd.f32 %v708, %v723
        %v726 = vadd.f32 %v709, %v724
        %727 = vrot.lane.b32.xlu0 %v391, 112
        %v728 = vpop.permute.xlu0 %727
        %729 = vrot.lane.b32.xlu0 %v392, 112
        %v730 = vpop.permute.xlu0 %729
        %vm731 = vcmp.lt.s32.totalorder %v416, 112
        %v732 = vsel %vm731, %v728, %v730
        %v733 = vsel %vm731, %v730, %v728
        %734 = vrot.lane.b32.xlu0 %v401, 112
        %v735 = vpop.permute.xlu0 %734
        %736 = vrot.lane.b32.xlu0 %v410, 112
        %v737 = vpop.permute.xlu0 %736
        %v738 = vsel %vm731, %v735, %v737
        %v739 = vsel %vm731, %v737, %v735
        %s740 = scalar_lea.vmem %s3, 7
        %v741 = vld [vmem:[%s740] ss:$8 sm:$0x3]
        %v743 = vlaneseq
        %v744 = vshrl.u32 %v743, 7
        %v745 = vsub.s32 0, %v744
        %v746 = vrot.slane %v741, %v745
        %v747 = vlaneseq
        %v748 = vshrl.u32 %v747, 7
        %v749 = vsub.s32 1, %v748
        %v750 = vrot.slane %v741, %v749
        %v753 = vmul.f32 %v732, %v746
        %v754 = vmul.f32 %v733, %v750
        %v755 = vadd.f32 %v725, %v753
        %v756 = vadd.f32 %v726, %v754
        %s757 = scalar_lea.vmem %s4, 7
        %v758 = vld [vmem:[%s757] ss:$8 sm:$0x3]
        %v760 = vlaneseq
        %v761 = vshrl.u32 %v760, 7
        %v762 = vsub.s32 0, %v761
        %v763 = vrot.slane %v758, %v762
        %v764 = vlaneseq
        %v765 = vshrl.u32 %v764, 7
        %v766 = vsub.s32 1, %v765
        %v767 = vrot.slane %v758, %v766
        %v770 = vmul.f32 %v738, %v763
        %v771 = vmul.f32 %v739, %v767
        %v772 = vadd.f32 %v755, %v770
        %v773 = vadd.f32 %v756, %v771
        %774 = vrot.lane.b32.xlu0 %v391, 111
        %v775 = vpop.permute.xlu0 %774
        %776 = vrot.lane.b32.xlu0 %v392, 111
        %v777 = vpop.permute.xlu0 %776
        %vm778 = vcmp.lt.s32.totalorder %v416, 111
        %v779 = vsel %vm778, %v775, %v777
        %v780 = vsel %vm778, %v777, %v775
        %781 = vrot.lane.b32.xlu0 %v401, 111
        %v782 = vpop.permute.xlu0 %781
        %783 = vrot.lane.b32.xlu0 %v410, 111
        %v784 = vpop.permute.xlu0 %783
        %v785 = vsel %vm778, %v782, %v784
        %v786 = vsel %vm778, %v784, %v782
        %s787 = scalar_lea.vmem %s3, 16
        %v788 = vld [vmem:[%s787] ss:$8 sm:$0x3]
        %v790 = vlaneseq
        %v791 = vshrl.u32 %v790, 7
        %v792 = vsub.s32 0, %v791
        %v793 = vrot.slane %v788, %v792
        %v794 = vlaneseq
        %v795 = vshrl.u32 %v794, 7
        %v796 = vsub.s32 1, %v795
        %v797 = vrot.slane %v788, %v796
        %v800 = vmul.f32 %v779, %v793
        %v801 = vmul.f32 %v780, %v797
        %v802 = vadd.f32 %v772, %v800
        %v803 = vadd.f32 %v773, %v801
        %s804 = scalar_lea.vmem %s4, 16
        %v805 = vld [vmem:[%s804] ss:$8 sm:$0x3]
        %v807 = vlaneseq
        %v808 = vshrl.u32 %v807, 7
        %v809 = vsub.s32 0, %v808
        %v810 = vrot.slane %v805, %v809
        %v811 = vlaneseq
        %v812 = vshrl.u32 %v811, 7
        %v813 = vsub.s32 1, %v812
        %v814 = vrot.slane %v805, %v813
        %v817 = vmul.f32 %v785, %v810
        %v818 = vmul.f32 %v786, %v814
        %v819 = vadd.f32 %v802, %v817
        %v820 = vadd.f32 %v803, %v818
        %v821 = vstv %s279
        %v822 = vadd.f32 %v819, %v821
        %v823 = vadd.f32 %v820, %v821
        %v824 = vxor.u32 %v822, 2147483648
        %v825 = vxor.u32 %v823, 2147483648
        %v826 = vmul.f32 %v824, 1.442695
        %v827 = vpow.pop %v826
        %v828 = vmul.f32 %v825, 1.442695
        %v829 = vpow.pop %v828
        %v830 = vadd.f32 %v827, 1.0
        %v831 = vadd.f32 %v829, 1.0
        %v832 = vrcp.pop %v830
        %v833 = vmul.f32 1.0, %v832
        %v834 = vrcp.pop %v831
        %v835 = vmul.f32 1.0, %v834
        %v836 = vlaneseq
        %v837 = vshrl.u32 %v836, 7
        %v838 = vsub.s32 0, %v837
        %v839 = vrot.slane %v833, %v838
        %v840 = vlaneseq
        %v841 = vshrl.u32 %v840, 7
        %v842 = vsub.s32 0, %v841
        %v843 = vrot.slane %v835, %v842
        %v844 = vmul.f32 %v364, %v839
        %v845 = vmul.f32 %v365, %v843
        %v846 = vmul.f32 %v366, %v839
        %v847 = vmul.f32 %v367, %v843
        %v848 = vmul.f32 %v368, %v839
        %v849 = vmul.f32 %v369, %v843
        %v850 = vmul.f32 %v370, %v839
        %v851 = vmul.f32 %v371, %v843
        %852 = vst [vmem:[%s270] sm:$0xff] %v844
        %853 = vst [vmem:[%s270 + $0x8] sm:$0xff] %v845
        %854 = vst [vmem:[%s270 + $0x10] sm:$0xff] %v846
        %855 = vst [vmem:[%s270 + $0x18] sm:$0xff] %v847
        %856 = vst [vmem:[%s270 + $0x20] sm:$0xff] %v848
        %857 = vst [vmem:[%s270 + $0x28] sm:$0xff] %v849
        %858 = vst [vmem:[%s270 + $0x30] sm:$0xff] %v850
        %859 = vst [vmem:[%s270 + $0x38] sm:$0xff] %v851
        %s860 = sand.u32 %s163, 1
        %s861 = scalar_lea.sflag [#allocation5], %s860
        %s862 = sand.u32 %s163, 1
        %s863 = smul.addr %s862, 64
        %s864 = scalar_lea.vmem [#allocation6], %s863
        // Predicated region
        $region49: #{tpu_custom_call.1} parent=43 // pred_check
          %p865 = pneg %p173
        $region50: #{tpu_custom_call.1} parent=43 // pred_check_branch
          %867 = sbr.rel (%p865) target = $region52
        $region51: #{tpu_custom_call.1} parent=43 // pred_region
          %s869 = ssub.s32 1024, 1024
          %870 = vsyncadd %s861, %s869
          %s871 = smul.addr %s24, 8
          %s872 = smul.addr %s871, 128
          %s873 = scalar_lea.hbm %s6, %s872
          %s874 = sshll.u32 %s864, 4
          %s875 = int_to_ptr.vmem [resolvable:$true] %s874
          %880 = dma.vmem_to_hbm [thread:$0]  %s875, 1024, %s873, %s861, 256, 256, 16
        $region52: #{tpu_custom_call.1} parent=43 // pred_fallthru
          _
      $region44: #{tpu_custom_call.1} parent=5 // pred_fallthru
        _
      %p881 = scmp.le.s32.totalorder 2, %s19
      // Predicated region
      $region53: #{tpu_custom_call.1} parent=5 // pred_check
        %p882 = pneg %p881
      $region54: #{tpu_custom_call.1} parent=5 // pred_check_branch
        %884 = sbr.rel (%p882) target = $region56
      $region55: #{tpu_custom_call.1} parent=5 // pred_region
        %s885 = ssub.s32 %s19, 2
        // Predicated region
        $region57: #{tpu_custom_call.1} parent=55 // pred_check
          %p886 = pneg %p179
        $region58: #{tpu_custom_call.1} parent=55 // pred_check_branch
          %888 = sbr.rel (%p886) target = $region60
        $region59: #{tpu_custom_call.1} parent=55 // pred_region
          %s889 = sand.u32 %s164, 1
          %s890 = scalar_lea.sflag [#allocation5], %s889
          %s891 = sand.u32 %s164, 1
          %s892 = smul.addr %s891, 64
          %s893 = scalar_lea.vmem [#allocation6], %s892
          %894 = dma.done %s890, 1024
        $region60: #{tpu_custom_call.1} parent=55 // pred_fallthru
          _
      $region56: #{tpu_custom_call.1} parent=5 // pred_fallthru
        _
    $region6: #{tpu_custom_call.1} parent=1 // loop_footer
      %s23 = sadd.s32 1, %s19
    $region7: #{tpu_custom_call.1} parent=1 // loop_footer_branch
      %18 = sbr.rel target = $region3
    $region8: #{tpu_custom_call.1} parent=1 // loop_exit
      _
    %895 = vsyncpa [#allocation4], 1
    %s896 = scalar_lea.sflag [#allocation4], 1
    %897 = vsyncpa %s896, 1
    %898 = vsyncpa [#allocation5], 1
    %s899 = scalar_lea.sflag [#allocation5], 1
    %900 = vsyncpa %s899, 1

</llo_original>
